<compile_context>
chip_gen: v7x
topology: tpu7x:2x2x1
jax: 0.10.0
libtpu: 0.0.40
codegen_flags: <defaults>
</compile_context>

<pallas_src>
import jax
import jax.numpy as jnp
from jax import lax
from jax.experimental import pallas as pl
from jax.experimental.pallas import tpu as pltpu


# --------------------------------------------------------------------------- #
# Fast path: augmented factor tables resident in VMEM, in-VMEM row gather.
# --------------------------------------------------------------------------- #
def _mf_kernel_vmem(uidx_ref, cidx_ref,       # scalar-prefetch (SMEM) index arrays
                    gb_ref,                   # SMEM (1,) global bias
                    uf_tbl, cf_tbl,           # VMEM-resident augmented tables
                    out_ref,                  # (1, tb) lane-dense predictions
                    uf_buf, cf_buf):          # (tb, Fa) VMEM gather scratch
    tb = out_ref.shape[1]
    base = pl.multiple_of(pl.program_id(0) * tb, tb)

    def gather_row(r, carry):
        u = uidx_ref[base + r]
        c = cidx_ref[base + r]
        uf_buf[pl.ds(r, 1), :] = uf_tbl[pl.ds(u, 1), :]
        cf_buf[pl.ds(r, 1), :] = cf_tbl[pl.ds(c, 1), :]
        return carry

    lax.fori_loop(0, tb, gather_row, None, unroll=8)

    # f32 compute regardless of storage dtype (v5e has no bf16 VALU/EUP).
    uf = uf_buf[...].astype(jnp.float32)
    cf = cf_buf[...].astype(jnp.float32)
    dot = jnp.sum(uf * cf, axis=1)            # (tb,)  lane reduce (XLU)
    # TODO(synk): if compute ever shows on the critical path, gather into a
    # (Fa, tb) layout so the reduction is over sublanes and lands lane-dense.
    out_ref[...] = jax.nn.sigmoid(gb_ref[0] + dot)[None, :]


# --------------------------------------------------------------------------- #
# Fallback for tables too large for VMEM: per-row HBM DMA gather.
# --------------------------------------------------------------------------- #
def _mf_kernel_hbm(uidx_ref, cidx_ref,        # scalar-prefetch (SMEM) index arrays
                   gb_ref,                    # SMEM (1,) global bias
                   uf_hbm, cf_hbm,            # augmented tables, left in HBM
                   out_ref,                   # (1, tb) lane-dense predictions
                   uf_buf, cf_buf, sem):      # VMEM gather buffers + DMA semaphores
    tb = out_ref.shape[1]
    base = pl.multiple_of(pl.program_id(0) * tb, tb)

    # Issue one row-gather DMA per example of this tile (all copies in flight).
    # TODO(synk): sliding-window issue + cross-step double buffering to overlap
    # the gather with the previous tile's compute.
    def issue(r, carry):
        u = uidx_ref[base + r]
        c = cidx_ref[base + r]
        pltpu.make_async_copy(uf_hbm.at[pl.ds(u, 1)], uf_buf.at[pl.ds(r, 1)],
                              sem.at[0]).start()
        pltpu.make_async_copy(cf_hbm.at[pl.ds(c, 1)], cf_buf.at[pl.ds(r, 1)],
                              sem.at[1]).start()
        return carry

    lax.fori_loop(0, tb, issue, None, unroll=8)

    # ONE aggregate wait per table: the tb row copies on each semaphore sum to
    # the same byte count as one (tb, Fa) copy.  (Wrapper guarantees the tables
    # have at least tb rows on this path.)
    pltpu.make_async_copy(uf_hbm.at[pl.ds(0, tb)], uf_buf, sem.at[0]).wait()
    pltpu.make_async_copy(cf_hbm.at[pl.ds(0, tb)], cf_buf, sem.at[1]).wait()

    uf = uf_buf[...].astype(jnp.float32)
    cf = cf_buf[...].astype(jnp.float32)
    dot = jnp.sum(uf * cf, axis=1)
    out_ref[...] = jax.nn.sigmoid(gb_ref[0] + dot)[None, :]


# --------------------------------------------------------------------------- #
# Wrapper
# --------------------------------------------------------------------------- #
def matrix_factorization_forward(params, user_indices, course_indices, *,
                                 tile=2048, vmem_table_budget_bytes=8 * 2**20,
                                 force_hbm_gather=False):
    """Replicates MatrixFactorization.forward: sigmoid(gb + ub + cb + <uf, cf>)."""
    B = int(user_indices.shape[0])
    n_users, F = params["user_factors"].shape
    n_courses = params["course_factors"].shape[0]
    factor_dtype = params["user_factors"].dtype
    Fa = F + 2

    # Fuse biases into the factor tables (one-time, tiny; can be precomputed).
    aug_u = jnp.concatenate(
        [params["user_factors"],
         params["user_biases"].astype(factor_dtype),
         jnp.ones((n_users, 1), factor_dtype)], axis=1)
    aug_c = jnp.concatenate(
        [params["course_factors"],
         jnp.ones((n_courses, 1), factor_dtype),
         params["course_biases"].astype(factor_dtype)], axis=1)

    # Batch tiling: single block for tiny batches; otherwise >= 2 tiles of
    # 128-aligned rows so v7x megacore ("parallel") has work for both cores.
    if B <= 128:
        tb = B
    else:
        tb = max(128, min(tile, 128 * pl.cdiv(pl.cdiv(B, 2), 128)))
    b_pad = pl.cdiv(B, tb) * tb
    num_tiles = b_pad // tb

    # Padded tail entries gather row 0 (harmless; sliced off below).
    uidx = jnp.pad(user_indices.astype(jnp.int32), (0, b_pad - B))
    cidx = jnp.pad(course_indices.astype(jnp.int32), (0, b_pad - B))
    # TODO(synk): for batches beyond ~100K rows, pass per-tile index blocks in
    # SMEM instead of scalar-prefetching the full arrays (SMEM capacity).

    itemsize = jnp.dtype(factor_dtype).itemsize

    def _vmem_padded_bytes(rows, cols):   # (8, 128) physical padding in VMEM
        return (pl.cdiv(rows, 8) * 8) * (pl.cdiv(cols, 128) * 128) * itemsize

    tables_vmem = _vmem_padded_bytes(n_users, Fa) + _vmem_padded_bytes(n_courses, Fa)
    use_vmem_tables = (not force_hbm_gather) and tables_vmem <= vmem_table_budget_bytes

    # Conservative VMEM estimate (2x for pipeline double buffering) -> only set
    # vmem_limit_bytes when the smallest platform default (16 MiB) may not fit.
    scratch_vmem = 2 * _vmem_padded_bytes(tb, Fa)
    out_vmem = 2 * 8 * (pl.cdiv(tb, 128) * 128) * 4
    est = scratch_vmem + out_vmem + (tables_vmem if use_vmem_tables else 0) + (1 << 20)
    vmem_limit = None if 2 * est <= 16 * 2**20 else int(min(56 * 2**20, 2 * est))

    out_spec = pl.BlockSpec((1, tb), lambda i, ui, ci: (0, i))
    gb_spec = pl.BlockSpec(memory_space=pltpu.MemorySpace.SMEM)

    if use_vmem_tables:
        kernel = _mf_kernel_vmem
        grid_spec = pltpu.PrefetchScalarGridSpec(
            num_scalar_prefetch=2,
            grid=(num_tiles,),
            in_specs=[
                gb_spec,                                                 # global_bias (1,)
                pl.BlockSpec((n_users, Fa), lambda i, ui, ci: (0, 0)),   # aug user table
                pl.BlockSpec((n_courses, Fa), lambda i, ui, ci: (0, 0)), # aug course table
            ],
            out_specs=out_spec,
            scratch_shapes=[pltpu.VMEM((tb, Fa), factor_dtype),
                            pltpu.VMEM((tb, Fa), factor_dtype)],
        )
    else:
        if n_users < tb or n_courses < tb:
            raise ValueError("HBM gather path expects >= tile rows per table; "
                             "tables this small always fit the VMEM fast path.")
        kernel = _mf_kernel_hbm
        grid_spec = pltpu.PrefetchScalarGridSpec(
            num_scalar_prefetch=2,
            grid=(num_tiles,),
            in_specs=[
                gb_spec,
                pl.BlockSpec(memory_space=pl.ANY),    # aug user table   (HBM)
                pl.BlockSpec(memory_space=pl.ANY),    # aug course table (HBM)
            ],
            out_specs=out_spec,
            scratch_shapes=[pltpu.VMEM((tb, Fa), factor_dtype),
                            pltpu.VMEM((tb, Fa), factor_dtype),
                            pltpu.SemaphoreType.DMA((2,))],
        )

    out_row = pl.pallas_call(
        kernel,
        out_shape=jax.ShapeDtypeStruct((1, b_pad), jnp.float32),
        grid_spec=grid_spec,
        compiler_params=pltpu.CompilerParams(
            dimension_semantics=("parallel",),
            vmem_limit_bytes=vmem_limit),
    )(uidx, cidx, params["global_bias"], aug_u, aug_c)

    return out_row[0, :B].reshape(B, 1)


def init_params(key, n_users, n_courses, n_factors):
    k_u, k_c = jax.random.split(key)
    return {
        "user_factors": 0.01 * jax.random.normal(k_u, (n_users, n_factors), jnp.float32),
        "course_factors": 0.01 * jax.random.normal(k_c, (n_courses, n_factors), jnp.float32),
        "user_biases": jnp.zeros((n_users, 1), jnp.float32),
        "course_biases": jnp.zeros((n_courses, 1), jnp.float32),
        "global_bias": jnp.zeros((1,), jnp.float32),
    }


def _reference(params, ui, ci):
    uf = jnp.take(params["user_factors"], ui, axis=0).astype(jnp.float32)
    cf = jnp.take(params["course_factors"], ci, axis=0).astype(jnp.float32)
    ub = jnp.take(params["user_biases"], ui, axis=0)
    cb = jnp.take(params["course_biases"], ci, axis=0)
    return jax.nn.sigmoid(params["global_bias"] + ub + cb +
                          jnp.sum(uf * cf, axis=1, keepdims=True))


if __name__ == "__main__":
    n_users, n_courses, n_factors = 64, 48, 32
    batch = 8

    key = jax.random.PRNGKey(0)
    k_p, k_bu, k_bc, k_ui, k_ci = jax.random.split(key, 5)
    params = init_params(k_p, n_users, n_courses, n_factors)
    # Non-zero biases so the fused-bias columns are actually exercised.
    params["user_biases"] = 0.05 * jax.random.normal(k_bu, (n_users, 1), jnp.float32)
    params["course_biases"] = 0.05 * jax.random.normal(k_bc, (n_courses, 1), jnp.float32)
    params["global_bias"] = jnp.array([0.1], jnp.float32)

    user_indices = jax.random.randint(k_ui, (batch,), 0, n_users, dtype=jnp.int32)
    course_indices = jax.random.randint(k_ci, (batch,), 0, n_courses, dtype=jnp.int32)

    # Small batch: single block, tables-in-VMEM fast path.
    out = jax.block_until_ready(
        matrix_factorization_forward(params, user_indices, course_indices))
    ref = _reference(params, user_indices, course_indices)
    assert out.shape == (batch, 1)
    assert jnp.allclose(out, ref, atol=1e-5), "mismatch vs reference (single block)"

    # Larger batch: exercises padding + >=2 parallel tiles (still fast path).
    batch2 = 300
    k2u, k2c = jax.random.split(jax.random.PRNGKey(1))
    ui2 = jax.random.randint(k2u, (batch2,), 0, n_users, dtype=jnp.int32)
    ci2 = jax.random.randint(k2c, (batch2,), 0, n_courses, dtype=jnp.int32)
    out2 = jax.block_until_ready(
        matrix_factorization_forward(params, ui2, ci2))
    ref2 = _reference(params, ui2, ci2)
    assert out2.shape == (batch2, 1)
    assert jnp.allclose(out2, ref2, atol=1e-5), "mismatch vs reference (tiled path)"

    print("KERNEL_OK")
</pallas_src>

<mosaic_0001>
module attributes {stable_mosaic.version = 11 : i64} {
  func.func @_mf_kernel_vmem(%arg0: i32, %arg1: memref<8xi32, #tpu.memory_space<smem>>, %arg2: memref<8xi32, #tpu.memory_space<smem>>, %arg3: memref<1xf32, #tpu.memory_space<smem>>, %arg4: memref<64x34xf32, #tpu.memory_space<vmem>>, %arg5: memref<48x34xf32, #tpu.memory_space<vmem>>, %arg6: memref<1x8xf32, #tpu.memory_space<vmem>>, %arg7: memref<8x34xf32, #tpu.memory_space<vmem>>, %arg8: memref<8x34xf32, #tpu.memory_space<vmem>>) attributes {dimension_semantics = [#tpu.dimension_semantics<parallel>], iteration_bounds = array<i64: 1>, scalar_prefetch = 2 : i64, scratch_operands = 2 : i64, tpu.core_type = #tpu.core_type<tc>, window_params = [{transform_indices = @transform_0, window_bounds = array<i64: 1>}, {pipeline_mode = #tpu.pipeline_mode<synchronous>, transform_indices = @transform_1, window_bounds = array<i64: 64, 34>}, {pipeline_mode = #tpu.pipeline_mode<synchronous>, transform_indices = @transform_2, window_bounds = array<i64: 48, 34>}, {transform_indices = @transform_3, window_bounds = array<i64: 1, 8>}]} {
    %c8_i32 = arith.constant 8 : i32
    %0 = arith.muli %arg0, %c8_i32 : i32
    %1 = tpu.assume_multiple %0, 8 : i32
    %c0_i32 = arith.constant 0 : i32
    %2 = arith.addi %1, %c0_i32 : i32
    %3 = arith.index_cast %2 : i32 to index
    %4 = memref.load %arg1[%3] : memref<8xi32, #tpu.memory_space<smem>>
    %5 = arith.addi %1, %c0_i32 : i32
    %6 = arith.index_cast %5 : i32 to index
    %7 = memref.load %arg2[%6] : memref<8xi32, #tpu.memory_space<smem>>
    %8 = arith.index_cast %4 : i32 to index
    %c0 = arith.constant 0 : index
    %9 = vector.load %arg4[%8, %c0] : memref<64x34xf32, #tpu.memory_space<vmem>>, vector<1x34xf32>
    %10 = arith.index_cast %c0_i32 : i32 to index
    %c0_0 = arith.constant 0 : index
    %11 = vector.load %arg7[%10, %c0_0] : memref<8x34xf32, #tpu.memory_space<vmem>>, vector<1x34xf32>
    tpu.vector_store %arg7[%10, %c0_0], %9 {strides = array<i32>} : memref<8x34xf32, #tpu.memory_space<vmem>>, vector<1x34xf32>,
    %12 = arith.index_cast %7 : i32 to index
    %c0_1 = arith.constant 0 : index
    %13 = vector.load %arg5[%12, %c0_1] : memref<48x34xf32, #tpu.memory_space<vmem>>, vector<1x34xf32>
    %14 = arith.index_cast %c0_i32 : i32 to index
    %c0_2 = arith.constant 0 : index
    %15 = vector.load %arg8[%14, %c0_2] : memref<8x34xf32, #tpu.memory_space<vmem>>, vector<1x34xf32>
    tpu.vector_store %arg8[%14, %c0_2], %13 {strides = array<i32>} : memref<8x34xf32, #tpu.memory_space<vmem>>, vector<1x34xf32>,
    %c1_i32 = arith.constant 1 : i32
    %16 = arith.addi %1, %c1_i32 : i32
    %17 = arith.index_cast %16 : i32 to index
    %18 = memref.load %arg1[%17] : memref<8xi32, #tpu.memory_space<smem>>
    %19 = arith.addi %1, %c1_i32 : i32
    %20 = arith.index_cast %19 : i32 to index
    %21 = memref.load %arg2[%20] : memref<8xi32, #tpu.memory_space<smem>>
    %22 = arith.index_cast %18 : i32 to index
    %c0_3 = arith.constant 0 : index
    %23 = vector.load %arg4[%22, %c0_3] : memref<64x34xf32, #tpu.memory_space<vmem>>, vector<1x34xf32>
    %24 = arith.index_cast %c1_i32 : i32 to index
    %c0_4 = arith.constant 0 : index
    %25 = vector.load %arg7[%24, %c0_4] : memref<8x34xf32, #tpu.memory_space<vmem>>, vector<1x34xf32>
    tpu.vector_store %arg7[%24, %c0_4], %23 {strides = array<i32>} : memref<8x34xf32, #tpu.memory_space<vmem>>, vector<1x34xf32>,
    %26 = arith.index_cast %21 : i32 to index
    %c0_5 = arith.constant 0 : index
    %27 = vector.load %arg5[%26, %c0_5] : memref<48x34xf32, #tpu.memory_space<vmem>>, vector<1x34xf32>
    %28 = arith.index_cast %c1_i32 : i32 to index
    %c0_6 = arith.constant 0 : index
    %29 = vector.load %arg8[%28, %c0_6] : memref<8x34xf32, #tpu.memory_space<vmem>>, vector<1x34xf32>
    tpu.vector_store %arg8[%28, %c0_6], %27 {strides = array<i32>} : memref<8x34xf32, #tpu.memory_space<vmem>>, vector<1x34xf32>,
    %c2_i32 = arith.constant 2 : i32
    %30 = arith.addi %1, %c2_i32 : i32
    %31 = arith.index_cast %30 : i32 to index
    %32 = memref.load %arg1[%31] : memref<8xi32, #tpu.memory_space<smem>>
    %33 = arith.addi %1, %c2_i32 : i32
    %34 = arith.index_cast %33 : i32 to index
    %35 = memref.load %arg2[%34] : memref<8xi32, #tpu.memory_space<smem>>
    %36 = arith.index_cast %32 : i32 to index
    %c0_7 = arith.constant 0 : index
    %37 = vector.load %arg4[%36, %c0_7] : memref<64x34xf32, #tpu.memory_space<vmem>>, vector<1x34xf32>
    %38 = arith.index_cast %c2_i32 : i32 to index
    %c0_8 = arith.constant 0 : index
    %39 = vector.load %arg7[%38, %c0_8] : memref<8x34xf32, #tpu.memory_space<vmem>>, vector<1x34xf32>
    tpu.vector_store %arg7[%38, %c0_8], %37 {strides = array<i32>} : memref<8x34xf32, #tpu.memory_space<vmem>>, vector<1x34xf32>,
    %40 = arith.index_cast %35 : i32 to index
    %c0_9 = arith.constant 0 : index
    %41 = vector.load %arg5[%40, %c0_9] : memref<48x34xf32, #tpu.memory_space<vmem>>, vector<1x34xf32>
    %42 = arith.index_cast %c2_i32 : i32 to index
    %c0_10 = arith.constant 0 : index
    %43 = vector.load %arg8[%42, %c0_10] : memref<8x34xf32, #tpu.memory_space<vmem>>, vector<1x34xf32>
    tpu.vector_store %arg8[%42, %c0_10], %41 {strides = array<i32>} : memref<8x34xf32, #tpu.memory_space<vmem>>, vector<1x34xf32>,
    %c3_i32 = arith.constant 3 : i32
    %44 = arith.addi %1, %c3_i32 : i32
    %45 = arith.index_cast %44 : i32 to index
    %46 = memref.load %arg1[%45] : memref<8xi32, #tpu.memory_space<smem>>
    %47 = arith.addi %1, %c3_i32 : i32
    %48 = arith.index_cast %47 : i32 to index
    %49 = memref.load %arg2[%48] : memref<8xi32, #tpu.memory_space<smem>>
    %50 = arith.index_cast %46 : i32 to index
    %c0_11 = arith.constant 0 : index
    %51 = vector.load %arg4[%50, %c0_11] : memref<64x34xf32, #tpu.memory_space<vmem>>, vector<1x34xf32>
    %52 = arith.index_cast %c3_i32 : i32 to index
    %c0_12 = arith.constant 0 : index
    %53 = vector.load %arg7[%52, %c0_12] : memref<8x34xf32, #tpu.memory_space<vmem>>, vector<1x34xf32>
    tpu.vector_store %arg7[%52, %c0_12], %51 {strides = array<i32>} : memref<8x34xf32, #tpu.memory_space<vmem>>, vector<1x34xf32>,
    %54 = arith.index_cast %49 : i32 to index
    %c0_13 = arith.constant 0 : index
    %55 = vector.load %arg5[%54, %c0_13] : memref<48x34xf32, #tpu.memory_space<vmem>>, vector<1x34xf32>
    %56 = arith.index_cast %c3_i32 : i32 to index
    %c0_14 = arith.constant 0 : index
    %57 = vector.load %arg8[%56, %c0_14] : memref<8x34xf32, #tpu.memory_space<vmem>>, vector<1x34xf32>
    tpu.vector_store %arg8[%56, %c0_14], %55 {strides = array<i32>} : memref<8x34xf32, #tpu.memory_space<vmem>>, vector<1x34xf32>,
    %c4_i32 = arith.constant 4 : i32
    %58 = arith.addi %1, %c4_i32 : i32
    %59 = arith.index_cast %58 : i32 to index
    %60 = memref.load %arg1[%59] : memref<8xi32, #tpu.memory_space<smem>>
    %61 = arith.addi %1, %c4_i32 : i32
    %62 = arith.index_cast %61 : i32 to index
    %63 = memref.load %arg2[%62] : memref<8xi32, #tpu.memory_space<smem>>
    %64 = arith.index_cast %60 : i32 to index
    %c0_15 = arith.constant 0 : index
    %65 = vector.load %arg4[%64, %c0_15] : memref<64x34xf32, #tpu.memory_space<vmem>>, vector<1x34xf32>
    %66 = arith.index_cast %c4_i32 : i32 to index
    %c0_16 = arith.constant 0 : index
    %67 = vector.load %arg7[%66, %c0_16] : memref<8x34xf32, #tpu.memory_space<vmem>>, vector<1x34xf32>
    tpu.vector_store %arg7[%66, %c0_16], %65 {strides = array<i32>} : memref<8x34xf32, #tpu.memory_space<vmem>>, vector<1x34xf32>,
    %68 = arith.index_cast %63 : i32 to index
    %c0_17 = arith.constant 0 : index
    %69 = vector.load %arg5[%68, %c0_17] : memref<48x34xf32, #tpu.memory_space<vmem>>, vector<1x34xf32>
    %70 = arith.index_cast %c4_i32 : i32 to index
    %c0_18 = arith.constant 0 : index
    %71 = vector.load %arg8[%70, %c0_18] : memref<8x34xf32, #tpu.memory_space<vmem>>, vector<1x34xf32>
    tpu.vector_store %arg8[%70, %c0_18], %69 {strides = array<i32>} : memref<8x34xf32, #tpu.memory_space<vmem>>, vector<1x34xf32>,
    %c5_i32 = arith.constant 5 : i32
    %72 = arith.addi %1, %c5_i32 : i32
    %73 = arith.index_cast %72 : i32 to index
    %74 = memref.load %arg1[%73] : memref<8xi32, #tpu.memory_space<smem>>
    %75 = arith.addi %1, %c5_i32 : i32
    %76 = arith.index_cast %75 : i32 to index
    %77 = memref.load %arg2[%76] : memref<8xi32, #tpu.memory_space<smem>>
    %78 = arith.index_cast %74 : i32 to index
    %c0_19 = arith.constant 0 : index
    %79 = vector.load %arg4[%78, %c0_19] : memref<64x34xf32, #tpu.memory_space<vmem>>, vector<1x34xf32>
    %80 = arith.index_cast %c5_i32 : i32 to index
    %c0_20 = arith.constant 0 : index
    %81 = vector.load %arg7[%80, %c0_20] : memref<8x34xf32, #tpu.memory_space<vmem>>, vector<1x34xf32>
    tpu.vector_store %arg7[%80, %c0_20], %79 {strides = array<i32>} : memref<8x34xf32, #tpu.memory_space<vmem>>, vector<1x34xf32>,
    %82 = arith.index_cast %77 : i32 to index
    %c0_21 = arith.constant 0 : index
    %83 = vector.load %arg5[%82, %c0_21] : memref<48x34xf32, #tpu.memory_space<vmem>>, vector<1x34xf32>
    %84 = arith.index_cast %c5_i32 : i32 to index
    %c0_22 = arith.constant 0 : index
    %85 = vector.load %arg8[%84, %c0_22] : memref<8x34xf32, #tpu.memory_space<vmem>>, vector<1x34xf32>
    tpu.vector_store %arg8[%84, %c0_22], %83 {strides = array<i32>} : memref<8x34xf32, #tpu.memory_space<vmem>>, vector<1x34xf32>,
    %c6_i32 = arith.constant 6 : i32
    %86 = arith.addi %1, %c6_i32 : i32
    %87 = arith.index_cast %86 : i32 to index
    %88 = memref.load %arg1[%87] : memref<8xi32, #tpu.memory_space<smem>>
    %89 = arith.addi %1, %c6_i32 : i32
    %90 = arith.index_cast %89 : i32 to index
    %91 = memref.load %arg2[%90] : memref<8xi32, #tpu.memory_space<smem>>
    %92 = arith.index_cast %88 : i32 to index
    %c0_23 = arith.constant 0 : index
    %93 = vector.load %arg4[%92, %c0_23] : memref<64x34xf32, #tpu.memory_space<vmem>>, vector<1x34xf32>
    %94 = arith.index_cast %c6_i32 : i32 to index
    %c0_24 = arith.constant 0 : index
    %95 = vector.load %arg7[%94, %c0_24] : memref<8x34xf32, #tpu.memory_space<vmem>>, vector<1x34xf32>
    tpu.vector_store %arg7[%94, %c0_24], %93 {strides = array<i32>} : memref<8x34xf32, #tpu.memory_space<vmem>>, vector<1x34xf32>,
    %96 = arith.index_cast %91 : i32 to index
    %c0_25 = arith.constant 0 : index
    %97 = vector.load %arg5[%96, %c0_25] : memref<48x34xf32, #tpu.memory_space<vmem>>, vector<1x34xf32>
    %98 = arith.index_cast %c6_i32 : i32 to index
    %c0_26 = arith.constant 0 : index
    %99 = vector.load %arg8[%98, %c0_26] : memref<8x34xf32, #tpu.memory_space<vmem>>, vector<1x34xf32>
    tpu.vector_store %arg8[%98, %c0_26], %97 {strides = array<i32>} : memref<8x34xf32, #tpu.memory_space<vmem>>, vector<1x34xf32>,
    %c7_i32 = arith.constant 7 : i32
    %100 = arith.addi %1, %c7_i32 : i32
    %101 = arith.index_cast %100 : i32 to index
    %102 = memref.load %arg1[%101] : memref<8xi32, #tpu.memory_space<smem>>
    %103 = arith.addi %1, %c7_i32 : i32
    %104 = arith.index_cast %103 : i32 to index
    %105 = memref.load %arg2[%104] : memref<8xi32, #tpu.memory_space<smem>>
    %106 = arith.index_cast %102 : i32 to index
    %c0_27 = arith.constant 0 : index
    %107 = vector.load %arg4[%106, %c0_27] : memref<64x34xf32, #tpu.memory_space<vmem>>, vector<1x34xf32>
    %108 = arith.index_cast %c7_i32 : i32 to index
    %c0_28 = arith.constant 0 : index
    %109 = vector.load %arg7[%108, %c0_28] : memref<8x34xf32, #tpu.memory_space<vmem>>, vector<1x34xf32>
    tpu.vector_store %arg7[%108, %c0_28], %107 {strides = array<i32>} : memref<8x34xf32, #tpu.memory_space<vmem>>, vector<1x34xf32>,
    %110 = arith.index_cast %105 : i32 to index
    %c0_29 = arith.constant 0 : index
    %111 = vector.load %arg5[%110, %c0_29] : memref<48x34xf32, #tpu.memory_space<vmem>>, vector<1x34xf32>
    %112 = arith.index_cast %c7_i32 : i32 to index
    %c0_30 = arith.constant 0 : index
    %113 = vector.load %arg8[%112, %c0_30] : memref<8x34xf32, #tpu.memory_space<vmem>>, vector<1x34xf32>
    tpu.vector_store %arg8[%112, %c0_30], %111 {strides = array<i32>} : memref<8x34xf32, #tpu.memory_space<vmem>>, vector<1x34xf32>,
    %c8_i32_31 = arith.constant 8 : i32
    %c0_32 = arith.constant 0 : index
    %c0_33 = arith.constant 0 : index
    %114 = vector.load %arg7[%c0_32, %c0_33] : memref<8x34xf32, #tpu.memory_space<vmem>>, vector<8x34xf32>
    %c0_34 = arith.constant 0 : index
    %c0_35 = arith.constant 0 : index
    %115 = vector.load %arg8[%c0_34, %c0_35] : memref<8x34xf32, #tpu.memory_space<vmem>>, vector<8x34xf32>
    %116 = arith.mulf %114, %115 : vector<8x34xf32>
    %cst = arith.constant dense<0.000000e+00> : vector<8xf32>
    %117 = vector.multi_reduction <add>, %116, %cst [1] : vector<8x34xf32> to vector<8xf32>
    %c0_36 = arith.constant 0 : index
    %118 = memref.load %arg3[%c0_36] : memref<1xf32, #tpu.memory_space<smem>>
    %119 = vector.broadcast %118 : f32 to vector<8xf32>
    %120 = arith.addf %119, %117 : vector<8xf32>
    %121 = arith.negf %120 : vector<8xf32>
    %122 = math.exp %121 : vector<8xf32>
    %cst_37 = arith.constant 1.000000e+00 : f32
    %123 = vector.broadcast %cst_37 : f32 to vector<8xf32>
    %124 = arith.addf %123, %122 : vector<8xf32>
    %125 = arith.divf %123, %124 : vector<8xf32>
    %126 = vector.shape_cast %125 : vector<8xf32> to vector<1x8xf32>
    %c0_38 = arith.constant 0 : index
    %c0_39 = arith.constant 0 : index
    %127 = vector.load %arg6[%c0_38, %c0_39] : memref<1x8xf32, #tpu.memory_space<vmem>>, vector<1x8xf32>
    tpu.vector_store %arg6[%c0_38, %c0_39], %126 {strides = array<i32>} : memref<1x8xf32, #tpu.memory_space<vmem>>, vector<1x8xf32>,
    return
  }
  func.func @transform_0(%arg0: i32, %arg1: memref<8xi32, #tpu.memory_space<smem>>, %arg2: memref<8xi32, #tpu.memory_space<smem>>) -> i32 {
    %c0_i32 = arith.constant 0 : i32
    %c0_i32_0 = arith.constant 0 : i32
    return %c0_i32 : i32
  }
  func.func @transform_1(%arg0: i32, %arg1: memref<8xi32, #tpu.memory_space<smem>>, %arg2: memref<8xi32, #tpu.memory_space<smem>>) -> (i32, i32) {
    %c0_i32 = arith.constant 0 : i32
    %c0_i32_0 = arith.constant 0 : i32
    %c0_i32_1 = arith.constant 0 : i32
    return %c0_i32, %c0_i32_0 : i32, i32
  }
  func.func @transform_2(%arg0: i32, %arg1: memref<8xi32, #tpu.memory_space<smem>>, %arg2: memref<8xi32, #tpu.memory_space<smem>>) -> (i32, i32) {
    %c0_i32 = arith.constant 0 : i32
    %c0_i32_0 = arith.constant 0 : i32
    %c0_i32_1 = arith.constant 0 : i32
    return %c0_i32, %c0_i32_0 : i32, i32
  }
  func.func @transform_3(%arg0: i32, %arg1: memref<8xi32, #tpu.memory_space<smem>>, %arg2: memref<8xi32, #tpu.memory_space<smem>>) -> (i32, i32) {
    %c0_i32 = arith.constant 0 : i32
    %c0_i32_0 = arith.constant 0 : i32
    return %c0_i32, %arg0 : i32, i32
  }
}

</mosaic_0001>

<llo_original>
// kernel: tpu_custom_call.1
$region0: #{tpu_custom_call.1}
  #allocation0 [shape = 'u32[]', space=smem, size = 0x4, offset = 0x4, fixed_abs, tag = 'smem constant byte address 0x4 - core index']
  #allocation1 [shape = 'u32[144,128]{1,0:T(1,128)}', space=vmem, size = 0x12000, scoped, tag = 'internal scratch']
  #allocation2 [shape = 'f32[8,34]{1,0:T(8,128)}', space=vmem, size = 0x1000, scoped, tag = 'scratch operand']
  #allocation3 [shape = 'f32[8,34]{1,0:T(8,128)}', space=vmem, size = 0x1000, scoped, tag = 'scratch operand']
  #allocation4 [shape = 's32[1]{0}', space=sflag, size = 0x4, scoped, tag = 'scoped memory for tpu_custom_call.1']
  #allocation5 [shape = 'u8[512]{0}', space=smem, size = 0x200, scoped, tag = 'prefetched SMEM operand 0']
  #allocation6 [shape = 'u8[512]{0}', space=smem, size = 0x200, scoped, tag = 'prefetched SMEM operand 1']
  #allocation7 [shape = 'f32[1]{0:T(128)S(6)}', space=smem, size = 0x200, scoped, tag = 'scoped memory for tpu_custom_call.1']
  %s0 = inlined_call_operand.vmem [shape: s32[8], index: 0, kind: input, shape index: {}]
  %s1 = inlined_call_operand.vmem [shape: s32[8], index: 1, kind: input, shape index: {}]
  %s2 = inlined_call_operand.<no memory space> [shape: f32[1], index: 2, kind: input, shape index: {}]
  %s3 = inlined_call_operand.vmem [shape: f32[64,34], index: 3, kind: input, shape index: {}]
  %s4 = inlined_call_operand.vmem [shape: f32[48,34], index: 4, kind: input, shape index: {}]
  %s5 = inlined_call_operand.hbm [shape: f32[1,8], index: 5, kind: output, shape index: {}]
  %s6 = sld [smem:[#allocation0]]
  $region22: #{tpu_custom_call.1} parent=0
    _
  %s8 = ssub.s32 1, %s6
  %s9 = scalar_select 0, %s8, %s6
  %s10 = sshll.u32 %s0, 4
  %s11 = int_to_ptr.vmem [resolvable:$true] %s10
  %13 = dma.vmem_to_smem %s11, 16, [#allocation5], [#allocation4]
  %s14 = sshll.u32 %s1, 4
  %s15 = int_to_ptr.vmem [resolvable:$true] %s14
  %17 = dma.vmem_to_smem %s15, 16, [#allocation6], [#allocation4]
  %18 = sst [smem:[#allocation7]] %s2
  %19 = dma.done [#allocation4], 32
  %20 = sfence
  $region1: #{tpu_custom_call.1} parent=0
    #allocation8 [shape = 'u8[512]{0}', space=vmem, size = 0x400, scoped, tag = 'output window, operand 0, single buffered']
    #allocation9 [shape = 's32[1]{0}', space=sflag, size = 0x4, scoped, tag = 'scoped memory for tpu_custom_call.1']
    %21 = vsyncpa [#allocation9], 0
    // Predicated region
    $region2: #{tpu_custom_call.1} parent=1 // pred_check
      _
    $region3: #{tpu_custom_call.1} parent=1 // pred_check_branch
      %23 = sbr.rel (0) target = $region5
    $region4: #{tpu_custom_call.1} parent=1 // pred_region
      _
    $region5: #{tpu_custom_call.1} parent=1 // pred_fallthru
      _
    // Predicated region
    $region6: #{tpu_custom_call.1} parent=1 // pred_check
      _
    $region7: #{tpu_custom_call.1} parent=1 // pred_check_branch
      %25 = sbr.rel (0) target = $region9
    $region8: #{tpu_custom_call.1} parent=1 // pred_region
      _
    $region9: #{tpu_custom_call.1} parent=1 // pred_fallthru
      _
    // Predicated region
    $region10: #{tpu_custom_call.1} parent=1 // pred_check
      _
    $region11: #{tpu_custom_call.1} parent=1 // pred_check_branch
      %27 = sbr.rel (0) target = $region13
    $region12: #{tpu_custom_call.1} parent=1 // pred_region
      _
    $region13: #{tpu_custom_call.1} parent=1 // pred_fallthru
      _
    %s28 = smul.u32 0, 8
    %s29 = sld [smem:[#allocation5 + %s28]]
    %s30 = sld [smem:[#allocation6 + %s28]]
    %s31 = scalar_lea.vmem %s3, %s29
    %v32 = vld [vmem:[%s31] sm:$0x1]
    %vm33 = vcmask 270336
    %34 = vst.msk [vmem:[#allocation2] sm:$0x1] %vm33, %v32
    %s35 = scalar_lea.vmem %s4, %s30
    %v36 = vld [vmem:[%s35] sm:$0x1]
    %37 = vst.msk [vmem:[#allocation3] sm:$0x1] %vm33, %v36
    %s38 = sadd.s32 %s28, 1
    %s39 = sld [smem:[#allocation5 + %s38]]
    %s40 = sld [smem:[#allocation6 + %s38]]
    %s41 = scalar_lea.vmem %s3, %s39
    %v42 = vld [vmem:[%s41] sm:$0x1]
    %43 = vst.msk [vmem:[#allocation2 + $0x1] sm:$0x1] %vm33, %v42
    %s44 = scalar_lea.vmem %s4, %s40
    %v45 = vld [vmem:[%s44] sm:$0x1]
    %46 = vst.msk [vmem:[#allocation3 + $0x1] sm:$0x1] %vm33, %v45
    %s47 = sadd.s32 %s28, 2
    %s48 = sld [smem:[#allocation5 + %s47]]
    %s49 = sld [smem:[#allocation6 + %s47]]
    %s50 = scalar_lea.vmem %s3, %s48
    %v51 = vld [vmem:[%s50] sm:$0x1]
    %52 = vst.msk [vmem:[#allocation2 + $0x2] sm:$0x1] %vm33, %v51
    %s53 = scalar_lea.vmem %s4, %s49
    %v54 = vld [vmem:[%s53] sm:$0x1]
    %55 = vst.msk [vmem:[#allocation3 + $0x2] sm:$0x1] %vm33, %v54
    %s56 = sadd.s32 %s28, 3
    %s57 = sld [smem:[#allocation5 + %s56]]
    %s58 = sld [smem:[#allocation6 + %s56]]
    %s59 = scalar_lea.vmem %s3, %s57
    %v60 = vld [vmem:[%s59] sm:$0x1]
    %61 = vst.msk [vmem:[#allocation2 + $0x3] sm:$0x1] %vm33, %v60
    %s62 = scalar_lea.vmem %s4, %s58
    %v63 = vld [vmem:[%s62] sm:$0x1]
    %64 = vst.msk [vmem:[#allocation3 + $0x3] sm:$0x1] %vm33, %v63
    %s65 = sadd.s32 %s28, 4
    %s66 = sld [smem:[#allocation5 + %s65]]
    %s67 = sld [smem:[#allocation6 + %s65]]
    %s68 = scalar_lea.vmem %s3, %s66
    %v69 = vld [vmem:[%s68] sm:$0x1]
    %70 = vst.msk [vmem:[#allocation2 + $0x4] sm:$0x1] %vm33, %v69
    %s71 = scalar_lea.vmem %s4, %s67
    %v72 = vld [vmem:[%s71] sm:$0x1]
    %73 = vst.msk [vmem:[#allocation3 + $0x4] sm:$0x1] %vm33, %v72
    %s74 = sadd.s32 %s28, 5
    %s75 = sld [smem:[#allocation5 + %s74]]
    %s76 = sld [smem:[#allocation6 + %s74]]
    %s77 = scalar_lea.vmem %s3, %s75
    %v78 = vld [vmem:[%s77] sm:$0x1]
    %79 = vst.msk [vmem:[#allocation2 + $0x5] sm:$0x1] %vm33, %v78
    %s80 = scalar_lea.vmem %s4, %s76
    %v81 = vld [vmem:[%s80] sm:$0x1]
    %82 = vst.msk [vmem:[#allocation3 + $0x5] sm:$0x1] %vm33, %v81
    %s83 = sadd.s32 %s28, 6
    %s84 = sld [smem:[#allocation5 + %s83]]
    %s85 = sld [smem:[#allocation6 + %s83]]
    %s86 = scalar_lea.vmem %s3, %s84
    %v87 = vld [vmem:[%s86] sm:$0x1]
    %88 = vst.msk [vmem:[#allocation2 + $0x6] sm:$0x1] %vm33, %v87
    %s89 = scalar_lea.vmem %s4, %s85
    %v90 = vld [vmem:[%s89] sm:$0x1]
    %91 = vst.msk [vmem:[#allocation3 + $0x6] sm:$0x1] %vm33, %v90
    %s92 = sadd.s32 %s28, 7
    %s93 = sld [smem:[#allocation5 + %s92]]
    %s94 = sld [smem:[#allocation6 + %s92]]
    %s95 = scalar_lea.vmem %s3, %s93
    %v96 = vld [vmem:[%s95] sm:$0x1]
    %97 = vst.msk [vmem:[#allocation2 + $0x7] sm:$0x1] %vm33, %v96
    %s98 = scalar_lea.vmem %s4, %s94
    %v99 = vld [vmem:[%s98] sm:$0x1]
    %100 = vst.msk [vmem:[#allocation3 + $0x7] sm:$0x1] %vm33, %v99
    %v101 = vld [vmem:[#allocation2] sm:$0xff]
    %v102 = vld [vmem:[#allocation3] sm:$0xff]
    %v103 = vmul.f32 %v101, %v102
    %vm104 = vcmask 277504
    %v105 = vsel %vm104, %v103, 0.0
    %106 = vadd.xlane.f32.xlu0 %v105
    %v107 = vpop.xlane.xlu0 %106
    %s108 = sld [smem:[#allocation7]]
    %v109 = vstv %s108
    %v110 = vadd.f32 %v109, %v107
    %v111 = vxor.u32 %v110, 2147483648
    %v112 = vmul.f32 %v111, 1.442695
    %v113 = vpow.pop %v112
    %v114 = vadd.f32 %v113, 1.0
    %v115 = vrcp.pop %v114
    %v116 = vmul.f32 1.0, %v115
    %v118 = vlaneseq
    %v119 = vand.u32 %v118, 127
    %v120 = vlaneseq
    %v121 = vshrl.u32 %v120, 7
    %v122 = vsub.s32 %v119, %v121
    %v123 = vrot.slane %v116, %v122
    %vm125 = vcmask 57344
    %126 = vst.msk [vmem:[#allocation8] sm:$0x1] %vm125, %v123
    // Predicated region
    $region14: #{tpu_custom_call.1} parent=1 // pred_check
      _
    $region15: #{tpu_custom_call.1} parent=1 // pred_check_branch
      %128 = sbr.rel (0) target = $region17
    $region16: #{tpu_custom_call.1} parent=1 // pred_region
      %s130 = ssub.s32 16, 16
      %131 = vsyncadd [#allocation9], %s130
      %s133 = sshll.u32 [#allocation8], 4
      %s134 = int_to_ptr.vmem [resolvable:$true] %s133
      %136 = dma.vmem_to_hbm [thread:$0]  %s134, 16, %s5, [#allocation9]
    $region17: #{tpu_custom_call.1} parent=1 // pred_fallthru
      _
    // Predicated region
    $region18: #{tpu_custom_call.1} parent=1 // pred_check
      _
    $region19: #{tpu_custom_call.1} parent=1 // pred_check_branch
      %138 = sbr.rel (0) target = $region21
    $region20: #{tpu_custom_call.1} parent=1 // pred_region
      %139 = dma.done [#allocation9], 16
    $region21: #{tpu_custom_call.1} parent=1 // pred_fallthru
      _
    %140 = vsyncpa [#allocation9], 1

</llo_original>
